<compile_context>
chip_gen: v5e
topology: v5e:2x2
jax: 0.10.0
libtpu: 0.0.40
codegen_flags: <defaults>
</compile_context>

<pallas_src>
import functools

import jax
import jax.numpy as jnp
from jax.experimental import pallas as pl
from jax.experimental.pallas import tpu as pltpu


def _round_up(x, m):
    return (x + m - 1) // m * m


# ------------------------------- the kernel --------------------------------

def _greedy_head_kernel(x_ref, out_ref, max_sc, idx_sc, *, bv):
    """Grid = (row_blocks, vocab_blocks); vocab axis is the reduction axis."""
    j = pl.program_id(1)

    @pl.when(j == 0)
    def _():
        max_sc[...] = jnp.full(max_sc.shape, -jnp.inf, jnp.float32)
        idx_sc[...] = jnp.zeros(idx_sc.shape, jnp.int32)

    blk = x_ref[...].astype(jnp.float32)                 # [bb, bv]  (f32 math)
    m = jnp.max(blk, axis=-1, keepdims=True)             # [bb, 1]
    col = jax.lax.broadcasted_iota(jnp.int32, blk.shape, 1)
    # first (lowest) column achieving the block max
    local = jnp.min(jnp.where(blk == m, col, bv), axis=-1, keepdims=True)
    cand = local + j * bv                                # global vocab index

    # strict '>' keeps the earliest-block occurrence on ties across blocks
    better = m > max_sc[...]
    idx_sc[...] = jnp.where(better, cand, idx_sc[...])
    max_sc[...] = jnp.where(better, m, max_sc[...])

    @pl.when(j == pl.num_programs(1) - 1)
    def _():
        out_ref[...] = idx_sc[...]


# ------------------------------ host wrapper --------------------------------

def greedy_head(m_logits, *, vocab_block=512, row_block=256):
    """argmax over the last dim of m_logits, keepdim=True, int32 indices."""
    orig_shape = m_logits.shape
    V = orig_shape[-1]
    rows = 1
    for d in orig_shape[:-1]:
        rows *= int(d)

    x = m_logits
    if not jnp.issubdtype(x.dtype, jnp.floating):
        x = x.astype(jnp.float32)          # module casts to float anyway
    x = x.reshape(rows, V)

    # Lane-aligned vocab tiling and sublane-aligned row tiling.
    bv = min(vocab_block, _round_up(V, 128))
    Vp = _round_up(V, bv)
    bb = min(row_block, _round_up(rows, 8))
    Rp = _round_up(rows, bb)

    if (Vp != V) or (Rp != rows):
        pad_val = float(jnp.finfo(x.dtype).min)   # never beats a real logit
        x = jnp.pad(x, ((0, Rp - rows), (0, Vp - V)), constant_values=pad_val)

    grid = (Rp // bb, Vp // bv)

    out = pl.pallas_call(
        functools.partial(_greedy_head_kernel, bv=bv),
        out_shape=jax.ShapeDtypeStruct((Rp, 1), jnp.int32),
        grid=grid,
        in_specs=[pl.BlockSpec((bb, bv), lambda i, j: (i, j))],
        out_specs=pl.BlockSpec((bb, 1), lambda i, j: (i, 0)),
        scratch_shapes=[pltpu.VMEM((bb, 1), jnp.float32),   # running max
                        pltpu.VMEM((bb, 1), jnp.int32)],    # running argmax
        compiler_params=pltpu.CompilerParams(
            dimension_semantics=("parallel", "arbitrary")),
    )(x)

    out = out[:rows]
    # TODO(synk): torch.topk returns int64 indices; TPU/JAX defaults to int32.
    return out.reshape(*orig_shape[:-1], 1)


# ----------------------------------- main -----------------------------------

if __name__ == "__main__":
    key = jax.random.PRNGKey(0)
    k1, k2 = jax.random.split(key)

    # Case 1: [batch, seq, vocab] f32 logits.
    logits_3d = jax.random.normal(k1, (2, 8, 512), jnp.float32)
    tok_3d = greedy_head(logits_3d)
    jax.block_until_ready(tok_3d)
    ref_3d = jnp.argmax(logits_3d.astype(jnp.float32), axis=-1,
                        keepdims=True).astype(jnp.int32)
    assert tok_3d.shape == (2, 8, 1)
    assert tok_3d.dtype == jnp.int32
    assert jnp.array_equal(tok_3d, ref_3d)

    # Case 2: [batch, vocab] bf16 logits with non-128-aligned vocab (padding path).
    logits_2d = jax.random.normal(k2, (4, 300), jnp.float32).astype(jnp.bfloat16)
    tok_2d = greedy_head(logits_2d)
    jax.block_until_ready(tok_2d)
    ref_2d = jnp.argmax(logits_2d.astype(jnp.float32), axis=-1,
                        keepdims=True).astype(jnp.int32)
    assert tok_2d.shape == (4, 1)
    assert jnp.array_equal(tok_2d, ref_2d)

    print("KERNEL_OK")
</pallas_src>

<mosaic_0001>
module attributes {stable_mosaic.version = 11 : i64} {
  func.func @_greedy_head_kernel(%arg0: i32, %arg1: i32, %arg2: memref<16x512xf32, #tpu.memory_space<vmem>>, %arg3: memref<16x1xi32, #tpu.memory_space<vmem>>, %arg4: memref<16x1xf32, #tpu.memory_space<vmem>>, %arg5: memref<16x1xi32, #tpu.memory_space<vmem>>) attributes {dimension_semantics = [#tpu.dimension_semantics<parallel>, #tpu.dimension_semantics<arbitrary>], iteration_bounds = array<i64: 1, 1>, scalar_prefetch = 0 : i64, scratch_operands = 2 : i64, tpu.core_type = #tpu.core_type<tc>, window_params = [{transform_indices = @transform_0, window_bounds = array<i64: 16, 512>}, {transform_indices = @transform_1, window_bounds = array<i64: 16, 1>}]} {
    %c0_i32 = arith.constant 0 : i32
    %0 = arith.cmpi eq, %arg1, %c0_i32 : i32
    %1 = arith.extui %0 : i1 to i32
    %c0_i32_0 = arith.constant 0 : i32
    %2 = arith.cmpi ne, %1, %c0_i32_0 : i32
    scf.if %2 {
      %cst_16 = arith.constant 0xFF800000 : f32
      %27 = vector.broadcast %cst_16 : f32 to vector<16x1xf32>
      %c0_17 = arith.constant 0 : index
      %c0_18 = arith.constant 0 : index
      %28 = vector.load %arg4[%c0_17, %c0_18] : memref<16x1xf32, #tpu.memory_space<vmem>>, vector<16x1xf32>
      tpu.vector_store %arg4[%c0_17, %c0_18], %27 {strides = array<i32>} : memref<16x1xf32, #tpu.memory_space<vmem>>, vector<16x1xf32>,
      %c0_i32_19 = arith.constant 0 : i32
      %29 = vector.broadcast %c0_i32_19 : i32 to vector<16x1xi32>
      %c0_20 = arith.constant 0 : index
      %c0_21 = arith.constant 0 : index
      %30 = vector.load %arg5[%c0_20, %c0_21] : memref<16x1xi32, #tpu.memory_space<vmem>>, vector<16x1xi32>
      tpu.vector_store %arg5[%c0_20, %c0_21], %29 {strides = array<i32>} : memref<16x1xi32, #tpu.memory_space<vmem>>, vector<16x1xi32>,
    } else {
    }
    %c0 = arith.constant 0 : index
    %c0_1 = arith.constant 0 : index
    %3 = vector.load %arg2[%c0, %c0_1] : memref<16x512xf32, #tpu.memory_space<vmem>>, vector<16x512xf32>
    %cst = arith.constant dense<0xFF800000> : vector<16xf32>
    %4 = vector.multi_reduction <maximumf>, %3, %cst [1] : vector<16x512xf32> to vector<16xf32>
    %5 = vector.shape_cast %4 : vector<16xf32> to vector<16x1xf32>
    %6 = tpu.iota {dimensions = array<i32: 1>} : vector<16x512xi32>
    %7 = vector.broadcast %5 : vector<16x1xf32> to vector<16x512xf32>
    %8 = arith.cmpf oeq, %3, %7 : vector<16x512xf32>
    %c512_i32 = arith.constant 512 : i32
    %9 = vector.broadcast %c512_i32 : i32 to vector<16x512xi32>
    %10 = arith.select %8, %6, %9 : vector<16x512xi1>, vector<16x512xi32>
    %cst_2 = arith.constant dense<2147483647> : vector<16xi32>
    %11 = vector.multi_reduction <minsi>, %10, %cst_2 [1] : vector<16x512xi32> to vector<16xi32>
    %12 = vector.shape_cast %11 : vector<16xi32> to vector<16x1xi32>
    %c512_i32_3 = arith.constant 512 : i32
    %13 = arith.muli %arg1, %c512_i32_3 : i32
    %14 = vector.broadcast %13 : i32 to vector<16x1xi32>
    %15 = arith.addi %12, %14 : vector<16x1xi32>
    %c0_4 = arith.constant 0 : index
    %c0_5 = arith.constant 0 : index
    %16 = vector.load %arg4[%c0_4, %c0_5] : memref<16x1xf32, #tpu.memory_space<vmem>>, vector<16x1xf32>
    %17 = arith.cmpf ogt, %5, %16 : vector<16x1xf32>
    %c0_6 = arith.constant 0 : index
    %c0_7 = arith.constant 0 : index
    %18 = vector.load %arg5[%c0_6, %c0_7] : memref<16x1xi32, #tpu.memory_space<vmem>>, vector<16x1xi32>
    %19 = arith.select %17, %15, %18 : vector<16x1xi1>, vector<16x1xi32>
    %c0_8 = arith.constant 0 : index
    %c0_9 = arith.constant 0 : index
    %20 = vector.load %arg5[%c0_8, %c0_9] : memref<16x1xi32, #tpu.memory_space<vmem>>, vector<16x1xi32>
    tpu.vector_store %arg5[%c0_8, %c0_9], %19 {strides = array<i32>} : memref<16x1xi32, #tpu.memory_space<vmem>>, vector<16x1xi32>,
    %c0_10 = arith.constant 0 : index
    %c0_11 = arith.constant 0 : index
    %21 = vector.load %arg4[%c0_10, %c0_11] : memref<16x1xf32, #tpu.memory_space<vmem>>, vector<16x1xf32>
    %22 = arith.select %17, %5, %21 : vector<16x1xi1>, vector<16x1xf32>
    %c0_12 = arith.constant 0 : index
    %c0_13 = arith.constant 0 : index
    %23 = vector.load %arg4[%c0_12, %c0_13] : memref<16x1xf32, #tpu.memory_space<vmem>>, vector<16x1xf32>
    tpu.vector_store %arg4[%c0_12, %c0_13], %22 {strides = array<i32>} : memref<16x1xf32, #tpu.memory_space<vmem>>, vector<16x1xf32>,
    %c0_i32_14 = arith.constant 0 : i32
    %24 = arith.cmpi eq, %arg1, %c0_i32_14 : i32
    %25 = arith.extui %24 : i1 to i32
    %c0_i32_15 = arith.constant 0 : i32
    %26 = arith.cmpi ne, %25, %c0_i32_15 : i32
    scf.if %26 {
      %c0_16 = arith.constant 0 : index
      %c0_17 = arith.constant 0 : index
      %27 = vector.load %arg5[%c0_16, %c0_17] : memref<16x1xi32, #tpu.memory_space<vmem>>, vector<16x1xi32>
      %c0_18 = arith.constant 0 : index
      %c0_19 = arith.constant 0 : index
      %28 = vector.load %arg3[%c0_18, %c0_19] : memref<16x1xi32, #tpu.memory_space<vmem>>, vector<16x1xi32>
      tpu.vector_store %arg3[%c0_18, %c0_19], %27 {strides = array<i32>} : memref<16x1xi32, #tpu.memory_space<vmem>>, vector<16x1xi32>,
    } else {
    }
    return
  }
  func.func @transform_0(%arg0: i32, %arg1: i32) -> (i32, i32) {
    %c0_i32 = arith.constant 0 : i32
    return %arg0, %arg1 : i32, i32
  }
  func.func @transform_1(%arg0: i32, %arg1: i32) -> (i32, i32) {
    %c0_i32 = arith.constant 0 : i32
    %c0_i32_0 = arith.constant 0 : i32
    return %arg0, %c0_i32 : i32, i32
  }
}

</mosaic_0001>

<llo_original>
// kernel: tpu_custom_call.1
$region0: #{tpu_custom_call.1}
  #allocation0 [shape = 'u32[]', space=smem, size = 0x4, offset = 0x4, fixed_abs, tag = 'smem constant byte address 0x4 - core index']
  #allocation1 [shape = 'u32[72,128]{1,0:T(1,128)}', space=vmem, size = 0x9000, scoped, tag = 'internal scratch']
  #allocation2 [shape = 'f32[16,1]{1,0:T(8,128)}', space=vmem, size = 0x2000, scoped, tag = 'scratch operand']
  #allocation3 [shape = 's32[16,1]{1,0:T(8,128)}', space=vmem, size = 0x2000, scoped, tag = 'scratch operand']
  %s0 = inlined_call_operand.hbm [shape: f32[16,512], index: 0, kind: input, shape index: {}]
  %s1 = inlined_call_operand.vmem [shape: s32[16,1], index: 1, kind: output, shape index: {}]
  %s2 = sld [smem:[#allocation0]]
  $region26: #{tpu_custom_call.1} parent=0
    _
  %s4 = ssub.s32 1, %s2
  %s5 = scalar_select 0, %s4, %s2
  $region1: #{tpu_custom_call.1} parent=0
    #allocation4 [shape = 'u8[32768]{0}', space=vmem, size = 0x8000, scoped, tag = 'input window, operand 0, single buffered']
    #allocation5 [shape = 's32[1]{0}', space=sflag, size = 0x4, scoped, tag = 'scoped memory for tpu_custom_call.1']
    %6 = vsyncpa [#allocation5], 0
    // Predicated region
    $region2: #{tpu_custom_call.1} parent=1 // pred_check
      _
    $region3: #{tpu_custom_call.1} parent=1 // pred_check_branch
      %8 = sbr.rel (0) target = $region5
    $region4: #{tpu_custom_call.1} parent=1 // pred_region
      %10 = vsyncadd [#allocation5], 0
      %s11 = sshll.u32 %s0, 4
      %s12 = int_to_ptr.hbm [resolvable:$true] %s11
      %s13 = sshll.u32 [#allocation4], 4
      %s14 = int_to_ptr.vmem [resolvable:$true] %s13
      %19 = dma.hbm_to_vmem [thread:$0]  %s12, 1024, %s14, [#allocation5], 512, 512, 32
    $region5: #{tpu_custom_call.1} parent=1 // pred_fallthru
      _
    // Predicated region
    $region6: #{tpu_custom_call.1} parent=1 // pred_check
      _
    $region7: #{tpu_custom_call.1} parent=1 // pred_check_branch
      %21 = sbr.rel (0) target = $region9
    $region8: #{tpu_custom_call.1} parent=1 // pred_region
      %23 = dma.done [#allocation5], 1024
    $region9: #{tpu_custom_call.1} parent=1 // pred_fallthru
      _
    %p24 = scmp.eq.s32.totalorder 0, 0
    // Predicated region
    $region10: #{tpu_custom_call.1} parent=1 // pred_check
      %p25 = pneg %p24
    $region11: #{tpu_custom_call.1} parent=1 // pred_check_branch
      %27 = sbr.rel (%p25) target = $region13
    $region12: #{tpu_custom_call.1} parent=1 // pred_region
      %vm28 = vcmask 7168
      %29 = vst.msk [vmem:[#allocation2] sm:$0xff] %vm28, -inf
      %30 = vst.msk [vmem:[#allocation2 + $0x8] sm:$0xff] %vm28, -inf
      %31 = vst.msk [vmem:[#allocation3] sm:$0xff] %vm28, 0
      %32 = vst.msk [vmem:[#allocation3 + $0x8] sm:$0xff] %vm28, 0
    $region13: #{tpu_custom_call.1} parent=1 // pred_fallthru
      _
    %v33 = vld [vmem:[#allocation4] sm:$0xff]
    %v34 = vld [vmem:[#allocation4 + $0x8] sm:$0xff]
    %v35 = vld [vmem:[#allocation4 + $0x10] sm:$0xff]
    %v36 = vld [vmem:[#allocation4 + $0x18] sm:$0xff]
    %v37 = vld [vmem:[#allocation4 + $0x20] sm:$0xff]
    %v38 = vld [vmem:[#allocation4 + $0x28] sm:$0xff]
    %v39 = vld [vmem:[#allocation4 + $0x30] sm:$0xff]
    %v40 = vld [vmem:[#allocation4 + $0x38] sm:$0xff]
    %v41 = vmax.f32 %v33, %v35
    %v42 = vmax.f32 %v34, %v36
    %v43 = vmax.f32 %v41, %v42
    %44 = vmax.xlane.f32.xlu0 %v43
    %v45 = vpop.xlane.xlu0 %44
    %v46 = vmax.f32 %v37, %v39
    %v47 = vmax.f32 %v38, %v40
    %v48 = vmax.f32 %v46, %v47
    %49 = vmax.xlane.f32.xlu0 %v48
    %v50 = vpop.xlane.xlu0 %49
    %v51 = vlaneseq
    %v52 = vand.u32 %v51, 127
    %v53 = vadd.s32 %v52, 128
    %v54 = vadd.s32 %v52, 256
    %v55 = vadd.s32 %v52, 384
    %vm56 = vcmp.eq.f32.partialorder %v33, %v45
    %vm57 = vcmp.eq.f32.partialorder %v34, %v45
    %vm58 = vcmp.eq.f32.partialorder %v35, %v45
    %vm59 = vcmp.eq.f32.partialorder %v36, %v45
    %vm60 = vcmp.eq.f32.partialorder %v37, %v50
    %vm61 = vcmp.eq.f32.partialorder %v38, %v50
    %vm62 = vcmp.eq.f32.partialorder %v39, %v50
    %vm63 = vcmp.eq.f32.partialorder %v40, %v50
    %v64 = vsel %vm56, %v52, 512
    %v65 = vsel %vm57, %v53, 512
    %v66 = vsel %vm58, %v54, 512
    %v67 = vsel %vm59, %v55, 512
    %v68 = vsel %vm60, %v52, 512
    %v69 = vsel %vm61, %v53, 512
    %v70 = vsel %vm62, %v54, 512
    %v71 = vsel %vm63, %v55, 512
    %vm72 = vcmp.lt.s32.totalorder %v64, %v66
    %v73 = vsel %vm72, %v64, %v66
    %vm74 = vcmp.lt.s32.totalorder %v65, %v67
    %v75 = vsel %vm74, %v65, %v67
    %vm76 = vcmp.lt.s32.totalorder %v73, %v75
    %v77 = vsel %vm76, %v73, %v75
    %v78 = vand.u32 %v77, 65535
    %v79 = vshra.s32 %v77, 16
    %v80 = vcvt.s32.f32 %v78
    %v81 = vcvt.s32.f32 %v79
    %82 = vmin.xlane.f32.xlu0 %v81
    %v83 = vpop.xlane.xlu0 %82
    %vm84 = vcmp.eq.f32.partialorder %v81, %v83
    %v85 = vsel %vm84, %v80, inf
    %86 = vmin.xlane.f32.xlu0 %v85
    %v87 = vpop.xlane.xlu0 %86
    %v88 = vcvt.f32.s32 %v87
    %v89 = vcvt.f32.s32 %v83
    %v90 = vshll.u32 %v89, 16
    %v91 = vadd.s32 %v90, %v88
    %vm92 = vcmp.lt.s32.totalorder %v68, %v70
    %v93 = vsel %vm92, %v68, %v70
    %vm94 = vcmp.lt.s32.totalorder %v69, %v71
    %v95 = vsel %vm94, %v69, %v71
    %vm96 = vcmp.lt.s32.totalorder %v93, %v95
    %v97 = vsel %vm96, %v93, %v95
    %v98 = vand.u32 %v97, 65535
    %v99 = vshra.s32 %v97, 16
    %v100 = vcvt.s32.f32 %v98
    %v101 = vcvt.s32.f32 %v99
    %102 = vmin.xlane.f32.xlu0 %v101
    %v103 = vpop.xlane.xlu0 %102
    %vm104 = vcmp.eq.f32.partialorder %v101, %v103
    %v105 = vsel %vm104, %v100, inf
    %106 = vmin.xlane.f32.xlu0 %v105
    %v107 = vpop.xlane.xlu0 %106
    %v108 = vcvt.f32.s32 %v107
    %v109 = vcvt.f32.s32 %v103
    %v110 = vshll.u32 %v109, 16
    %v111 = vadd.s32 %v110, %v108
    %s112 = smul.u32 0, 512
    %v113 = vstv %s112
    %v114 = vadd.s32 %v91, %v113
    %v115 = vadd.s32 %v111, %v113
    %v116 = vld [vmem:[#allocation2] sm:$0xff]
    %v117 = vld [vmem:[#allocation2 + $0x8] sm:$0xff]
    %vm118 = vcmp.gt.f32.partialorder %v45, %v116
    %vm119 = vcmp.gt.f32.partialorder %v50, %v117
    %v120 = vld [vmem:[#allocation3] sm:$0xff]
    %v121 = vld [vmem:[#allocation3 + $0x8] sm:$0xff]
    %v122 = vsel %vm118, %v114, %v120
    %v123 = vsel %vm119, %v115, %v121
    %vm124 = vcmask 7168
    %125 = vst.msk [vmem:[#allocation3] sm:$0xff] %vm124, %v122
    %126 = vst.msk [vmem:[#allocation3 + $0x8] sm:$0xff] %vm124, %v123
    %v127 = vld [vmem:[#allocation2] sm:$0xff]
    %v128 = vld [vmem:[#allocation2 + $0x8] sm:$0xff]
    %v129 = vsel %vm118, %v45, %v127
    %v130 = vsel %vm119, %v50, %v128
    %131 = vst.msk [vmem:[#allocation2] sm:$0xff] %vm124, %v129
    %132 = vst.msk [vmem:[#allocation2 + $0x8] sm:$0xff] %vm124, %v130
    // Predicated region
    $region14: #{tpu_custom_call.1} parent=1 // pred_check
      %p133 = pneg %p24
    $region15: #{tpu_custom_call.1} parent=1 // pred_check_branch
      %135 = sbr.rel (%p133) target = $region17
    $region16: #{tpu_custom_call.1} parent=1 // pred_region
      %v136 = vld [vmem:[#allocation3] sm:$0xff]
      %v137 = vld [vmem:[#allocation3 + $0x8] sm:$0xff]
      %138 = vst.msk [vmem:[%s1] sm:$0xff] %vm124, %v136
      %139 = vst.msk [vmem:[%s1 + $0x8] sm:$0xff] %vm124, %v137
    $region17: #{tpu_custom_call.1} parent=1 // pred_fallthru
      _
    // Predicated region
    $region18: #{tpu_custom_call.1} parent=1 // pred_check
      _
    $region19: #{tpu_custom_call.1} parent=1 // pred_check_branch
      %141 = sbr.rel (0) target = $region21
    $region20: #{tpu_custom_call.1} parent=1 // pred_region
      _
    $region21: #{tpu_custom_call.1} parent=1 // pred_fallthru
      _
    // Predicated region
    $region22: #{tpu_custom_call.1} parent=1 // pred_check
      _
    $region23: #{tpu_custom_call.1} parent=1 // pred_check_branch
      %143 = sbr.rel (0) target = $region25
    $region24: #{tpu_custom_call.1} parent=1 // pred_region
      _
    $region25: #{tpu_custom_call.1} parent=1 // pred_fallthru
      _
    %144 = vsyncpa [#allocation5], 1

</llo_original>
